<compile_context>
chip_gen: v7x
topology: tpu7x:2x2x1
jax: 0.10.0
libtpu: 0.0.40
codegen_flags: <defaults>
</compile_context>

<pallas_src>
import functools

import jax
import jax.numpy as jnp
from jax.experimental import pallas as pl
from jax.experimental.pallas import tpu as pltpu


_LANE = 128  # TPU lane width


def _round_up(x, m):
    return ((x + m - 1) // m) * m


def _argmax_acc_kernel(logits_ref, targets_ref, preds_ref, count_ref, *,
                       batch_size, tile_b):
    """One batch tile: argmax over classes + per-tile correct count.

    logits_ref : (tile_b, C)  input dtype (VMEM)
    targets_ref: (tile_b, 1)  int32 (VMEM)
    preds_ref  : (tile_b, 1)  int32 (VMEM, out)
    count_ref  : (1, 128)     float32 per-tile correct count (VMEM, out)
    """
    i = pl.program_id(0)

    logits = logits_ref[...]                       # native dtype, no cast
    num_classes = logits.shape[1]

    # torch.argmax semantics: first occurrence of the max wins.  Lane-axis
    # reductions on the native layout -- no full-tile transpose.
    # NOTE: rows containing NaN yield pred == num_classes (torch would return
    # the NaN index) -- only relevant if NaN logits are possible.
    row_max = jnp.max(logits, axis=1, keepdims=True)             # (tile_b, 1)
    cls_idx = jax.lax.broadcasted_iota(jnp.int32, logits.shape, 1)
    preds = jnp.min(jnp.where(logits == row_max, cls_idx, num_classes),
                    axis=1, keepdims=True)                       # (tile_b, 1) int32
    preds_ref[...] = preds

    # Mask rows past the true batch size (last tile may be ragged).
    row = jax.lax.broadcasted_iota(jnp.int32, (tile_b, 1), 0)
    valid = (i * tile_b + row) < batch_size
    hit = valid & (preds == targets_ref[...])
    cnt = jnp.sum(jnp.where(hit, 1.0, 0.0).astype(jnp.float32),
                  axis=0, keepdims=True)                         # (1, 1)
    count_ref[...] = jnp.broadcast_to(cnt, count_ref.shape)      # (1, 128)


def _vmem_budget():
    """Returns (per-(tile_b,C) int32 temp budget bytes, vmem_limit_bytes)."""
    try:
        cap = int(getattr(pltpu.get_tpu_info(), "vmem_capacity_bytes", 64 << 20))
    except Exception:
        cap = 64 << 20                      # conservative fallback (v7x per-TC)
    if cap >= (96 << 20):                   # v5e / v6e: 128 MiB physical VMEM
        return 8 << 20, 64 << 20
    return 4 << 20, 32 << 20                # v7x: 64 MiB physical per TC


def _choose_tile_b(batch, num_classes, budget):
    # Budget is for one int32-sized (tile_b, C) temporary (the iota / where
    # intermediates of the two-pass argmax).  Peak VMEM is roughly
    # 2x double-buffered logits tile (<= budget each) + ~2-3 such temps,
    # which stays under the vmem_limit chosen in _vmem_budget().
    rows = budget // max(1, num_classes * 4)
    rows = max(8, (rows // 8) * 8)
    tile_b = min(rows, _round_up(batch, 8))
    # v7x megacore: keep >= 2 tiles when the batch allows so both TCs get work.
    if pl.cdiv(batch, tile_b) < 2 and batch > 8:
        tile_b = max(8, _round_up(pl.cdiv(batch, 2), 8))
    return int(tile_b)


def argmax_accuracy(logits, targets, tile_b=None):
    """logits [B, C] (f32/bf16), targets [B] int -> (preds [B] int32, acc f32)."""
    B, C = logits.shape
    temp_budget, vmem_limit = _vmem_budget()
    if tile_b is None:
        tile_b = _choose_tile_b(B, C, temp_budget)
    assert tile_b % 8 == 0, "tile_b must be a multiple of 8 (sublane width)"

    n_tiles = pl.cdiv(B, tile_b)
    targets_col = targets.astype(jnp.int32).reshape(B, 1)

    kernel = functools.partial(_argmax_acc_kernel, batch_size=B, tile_b=tile_b)
    preds_col, counts = pl.pallas_call(
        kernel,
        out_shape=(
            jax.ShapeDtypeStruct((B, 1), jnp.int32),
            jax.ShapeDtypeStruct((1, n_tiles * _LANE), jnp.float32),
        ),
        grid_spec=pltpu.PrefetchScalarGridSpec(
            num_scalar_prefetch=0,
            grid=(n_tiles,),
            in_specs=[
                pl.BlockSpec((tile_b, C), lambda i: (i, 0)),   # logits tile
                pl.BlockSpec((tile_b, 1), lambda i: (i, 0)),   # targets column
            ],
            out_specs=(
                pl.BlockSpec((tile_b, 1), lambda i: (i, 0)),   # preds column
                pl.BlockSpec((1, _LANE), lambda i: (0, i)),    # per-tile counts
            ),
        ),
        compiler_params=pltpu.CompilerParams(
            dimension_semantics=("parallel",),   # shard tiles across TCs (v7x)
            vmem_limit_bytes=vmem_limit,
        ),
    )(logits, targets_col)

    preds = preds_col[:, 0]                                     # (B,)
    total_correct = counts.reshape(n_tiles, _LANE)[:, 0].sum()
    acc = total_correct / jnp.float32(B)
    return preds, acc


if __name__ == "__main__":
    key = jax.random.PRNGKey(0)
    k_logits, k_targets = jax.random.split(key)

    # Small demo: batch=200 (ragged vs the chosen tile -> exercises the
    # multi-tile grid and the valid-row mask), 128 classes.
    B, C = 200, 128
    logits = jax.random.normal(k_logits, (B, C), dtype=jnp.float32)
    rand_targets = jax.random.randint(k_targets, (B,), 0, C, dtype=jnp.int32)
    # Make ~1/3 of targets correct so the accuracy path is non-trivial.
    targets = jnp.where(jnp.arange(B) % 3 == 0,
                        jnp.argmax(logits, axis=1).astype(jnp.int32),
                        rand_targets)

    preds, acc = argmax_accuracy(logits, targets)
    jax.block_until_ready((preds, acc))

    # Sanity check against plain-JAX reference.
    ref_preds = jnp.argmax(logits, axis=1).astype(jnp.int32)
    ref_acc = (ref_preds == targets).astype(jnp.float32).mean()
    assert bool(jnp.all(preds == ref_preds)), "argmax mismatch"
    assert bool(jnp.allclose(acc, ref_acc)), "accuracy mismatch"

    print("KERNEL_OK")
</pallas_src>

<mosaic_0001>
module attributes {stable_mosaic.version = 11 : i64} {
  func.func @_argmax_acc_kernel(%arg0: i32, %arg1: memref<104x128xf32, #tpu.memory_space<vmem>>, %arg2: memref<104x1xi32, #tpu.memory_space<vmem>>, %arg3: memref<104x1xi32, #tpu.memory_space<vmem>>, %arg4: memref<1x128xf32, #tpu.memory_space<vmem>>) attributes {dimension_semantics = [#tpu.dimension_semantics<parallel>], iteration_bounds = array<i64: 2>, scalar_prefetch = 0 : i64, scratch_operands = 0 : i64, tpu.core_type = #tpu.core_type<tc>, window_params = [{transform_indices = @transform_0, window_bounds = array<i64: 104, 128>}, {transform_indices = @transform_1, window_bounds = array<i64: 104, 1>}, {transform_indices = @transform_2, window_bounds = array<i64: 104, 1>}, {transform_indices = @transform_3, window_bounds = array<i64: 1, 128>}]} {
    %c0 = arith.constant 0 : index
    %c0_0 = arith.constant 0 : index
    %0 = vector.load %arg1[%c0, %c0_0] : memref<104x128xf32, #tpu.memory_space<vmem>>, vector<104x128xf32>
    %cst = arith.constant dense<0xFF800000> : vector<104xf32>
    %1 = vector.multi_reduction <maximumf>, %0, %cst [1] : vector<104x128xf32> to vector<104xf32>
    %2 = vector.shape_cast %1 : vector<104xf32> to vector<104x1xf32>
    %3 = tpu.iota {dimensions = array<i32: 1>} : vector<104x128xi32>
    %4 = vector.broadcast %2 : vector<104x1xf32> to vector<104x128xf32>
    %5 = arith.cmpf oeq, %0, %4 : vector<104x128xf32>
    %c128_i32 = arith.constant 128 : i32
    %6 = vector.broadcast %c128_i32 : i32 to vector<104x128xi32>
    %7 = arith.select %5, %3, %6 : vector<104x128xi1>, vector<104x128xi32>
    %cst_1 = arith.constant dense<2147483647> : vector<104xi32>
    %8 = vector.multi_reduction <minsi>, %7, %cst_1 [1] : vector<104x128xi32> to vector<104xi32>
    %9 = vector.shape_cast %8 : vector<104xi32> to vector<104x1xi32>
    %c0_2 = arith.constant 0 : index
    %c0_3 = arith.constant 0 : index
    %10 = vector.load %arg3[%c0_2, %c0_3] : memref<104x1xi32, #tpu.memory_space<vmem>>, vector<104x1xi32>
    tpu.vector_store %arg3[%c0_2, %c0_3], %9 {strides = array<i32>} : memref<104x1xi32, #tpu.memory_space<vmem>>, vector<104x1xi32>,
    %11 = tpu.iota {dimensions = array<i32: 0>} : vector<104x1xi32>
    %c104_i32 = arith.constant 104 : i32
    %12 = arith.muli %arg0, %c104_i32 : i32
    %13 = vector.broadcast %12 : i32 to vector<104x1xi32>
    %14 = arith.addi %13, %11 : vector<104x1xi32>
    %c200_i32 = arith.constant 200 : i32
    %15 = vector.broadcast %c200_i32 : i32 to vector<104x1xi32>
    %16 = arith.cmpi slt, %14, %15 : vector<104x1xi32>
    %c0_4 = arith.constant 0 : index
    %c0_5 = arith.constant 0 : index
    %17 = vector.load %arg2[%c0_4, %c0_5] : memref<104x1xi32, #tpu.memory_space<vmem>>, vector<104x1xi32>
    %18 = arith.cmpi eq, %9, %17 : vector<104x1xi32>
    %19 = arith.andi %16, %18 : vector<104x1xi1>
    %cst_6 = arith.constant 1.000000e+00 : f32
    %cst_7 = arith.constant 0.000000e+00 : f32
    %20 = vector.broadcast %cst_6 : f32 to vector<104x1xf32>
    %21 = vector.broadcast %cst_7 : f32 to vector<104x1xf32>
    %22 = arith.select %19, %20, %21 : vector<104x1xi1>, vector<104x1xf32>
    %cst_8 = arith.constant dense<0.000000e+00> : vector<1xf32>
    %23 = vector.multi_reduction <add>, %22, %cst_8 [0] : vector<104x1xf32> to vector<1xf32>
    %24 = vector.shape_cast %23 : vector<1xf32> to vector<1x1xf32>
    %25 = vector.shape_cast %24 : vector<1x1xf32> to vector<1x1xf32>
    %26 = vector.broadcast %25 : vector<1x1xf32> to vector<1x128xf32>
    %c0_9 = arith.constant 0 : index
    %c0_10 = arith.constant 0 : index
    %27 = vector.load %arg4[%c0_9, %c0_10] : memref<1x128xf32, #tpu.memory_space<vmem>>, vector<1x128xf32>
    tpu.vector_store %arg4[%c0_9, %c0_10], %26 {strides = array<i32>} : memref<1x128xf32, #tpu.memory_space<vmem>>, vector<1x128xf32>,
    return
  }
  func.func @transform_0(%arg0: i32) -> (i32, i32) {
    %c0_i32 = arith.constant 0 : i32
    %c0_i32_0 = arith.constant 0 : i32
    return %arg0, %c0_i32 : i32, i32
  }
  func.func @transform_1(%arg0: i32) -> (i32, i32) {
    %c0_i32 = arith.constant 0 : i32
    %c0_i32_0 = arith.constant 0 : i32
    return %arg0, %c0_i32 : i32, i32
  }
  func.func @transform_2(%arg0: i32) -> (i32, i32) {
    %c0_i32 = arith.constant 0 : i32
    %c0_i32_0 = arith.constant 0 : i32
    return %arg0, %c0_i32 : i32, i32
  }
  func.func @transform_3(%arg0: i32) -> (i32, i32) {
    %c0_i32 = arith.constant 0 : i32
    %c0_i32_0 = arith.constant 0 : i32
    return %c0_i32, %arg0 : i32, i32
  }
}

</mosaic_0001>

<llo_original>
// kernel: tpu_custom_call.1
$region0: #{tpu_custom_call.1}
  #allocation0 [shape = 'u32[]', space=smem, size = 0x4, offset = 0x4, fixed_abs, tag = 'smem constant byte address 0x4 - core index']
  #allocation1 [shape = 'u32[144,128]{1,0:T(1,128)}', space=vmem, size = 0x12000, scoped, tag = 'internal scratch']
  %s0 = inlined_call_operand.vmem [shape: f32[200,128], index: 0, kind: input, shape index: {}]
  %s1 = inlined_call_operand.vmem [shape: s32[200,1], index: 1, kind: input, shape index: {}]
  %s2 = inlined_call_operand.vmem [shape: s32[200,1], index: 2, kind: output, shape index: {0}]
  %s3 = inlined_call_operand.hbm [shape: f32[1,256], index: 3, kind: output, shape index: {1}]
  %4 = xla_tuple %s2, %s3
  %s5 = sld [smem:[#allocation0]]
  $region97: #{tpu_custom_call.1} parent=0
    _
  %s7 = ssub.s32 1, %s5
  %s8 = scalar_select 0, %s7, %s5
  $region1: #{tpu_custom_call.1} parent=0
    #allocation2 [shape = 'u8[106496]{0}', space=vmem, size = 0x1a000, scoped, tag = 'output window, operand 0']
    #allocation3 [shape = 'u8[1024]{0}', space=vmem, size = 0x400, scoped, tag = 'output window, operand 1']
    #allocation4 [shape = 's32[2]{0}', space=sflag, size = 0x8, scoped, tag = 'scoped memory for tpu_custom_call.1']
    %9 = vsyncpa [#allocation4], 0
    %s10 = scalar_lea.sflag [#allocation4], 1
    %11 = vsyncpa %s10, 0
    loop: start=0, step=1, limit=4
    $region2: #{tpu_custom_call.1} parent=1 // loop_pre_header
      _
    $region3: #{tpu_custom_call.1} parent=1 // loop_header
      %s13 = sphi 0, %s17
      %p14 = scmp.ge.s32.totalorder %s13, 4
      %s23 = sphi 0, %s25
      %s26 = sphi 0, %s23
      %s27 = sphi 0, %s26
      %s43 = sphi 0, %s27
      %s49 = sphi 0, %s51
      %s52 = sphi 0, %s49
      %s53 = sphi 0, %s52
      %s69 = sphi 0, %s53
      %s75 = sphi 0, %s77
      %s78 = sphi 0, %s75
      %s79 = sphi 0, %s78
      %s95 = sphi 0, %s79
      %s101 = sphi 0, %s103
      %s104 = sphi 0, %s101
      %s105 = sphi 0, %s104
      %s121 = sphi 0, %s105
    $region4: #{tpu_custom_call.1} parent=1 // loop_header_branch
      %16 = sbr.rel (%p14) target = $region8
    $region5: #{tpu_custom_call.1} parent=1 // loop_body
      %s18 = ssub.s32 %s13, 1
      %s19 = ssub.s32 %s13, 2
      %s20 = sadd.s32 %s13, 1
      %s21 = ssub.s32 %s13, %s20
      %p22 = scmp.eq.s32.totalorder %s21, 0
      %s24 = sadd.s32 %s23, 1
      %s25 = scalar_select %p22, %s23, %s24
      %p28 = pneg %p22
      %p29 = scmp.eq.s32.totalorder %s13, 1
      %p30 = por %p28, %p29
      %p31 = scmp.ne.s32.totalorder %s23, %s26
      %p32 = scmp.eq.s32.totalorder %s13, 0
      %p33 = por %p31, %p32
      %p34 = scmp.ne.s32.totalorder %s23, %s26
      %p35 = scmp.eq.s32.totalorder %s18, 1
      %p36 = por %p34, %p35
      %p37 = scmp.ne.s32.totalorder %s26, %s27
      %p38 = scmp.eq.s32.totalorder %s18, 0
      %p39 = por %p37, %p38
      %p40 = scmp.ne.s32.totalorder %s26, %s27
      %p41 = scmp.eq.s32.totalorder %s19, 1
      %p42 = por %p40, %p41
      %p44 = scmp.ne.s32.totalorder %s27, %s43
      %p45 = scmp.eq.s32.totalorder %s19, 0
      %p46 = por %p44, %p45
      %s47 = ssub.s32 %s13, %s20
      %p48 = scmp.eq.s32.totalorder %s47, 0
      %s50 = sadd.s32 %s49, 1
      %s51 = scalar_select %p48, %s49, %s50
      %p54 = pneg %p48
      %p55 = scmp.eq.s32.totalorder %s13, 1
      %p56 = por %p54, %p55
      %p57 = scmp.ne.s32.totalorder %s49, %s52
      %p58 = scmp.eq.s32.totalorder %s13, 0
      %p59 = por %p57, %p58
      %p60 = scmp.ne.s32.totalorder %s49, %s52
      %p61 = scmp.eq.s32.totalorder %s18, 1
      %p62 = por %p60, %p61
      %p63 = scmp.ne.s32.totalorder %s52, %s53
      %p64 = scmp.eq.s32.totalorder %s18, 0
      %p65 = por %p63, %p64
      %p66 = scmp.ne.s32.totalorder %s52, %s53
      %p67 = scmp.eq.s32.totalorder %s19, 1
      %p68 = por %p66, %p67
      %p70 = scmp.ne.s32.totalorder %s53, %s69
      %p71 = scmp.eq.s32.totalorder %s19, 0
      %p72 = por %p70, %p71
      %s73 = ssub.s32 %s13, %s20
      %p74 = scmp.eq.s32.totalorder %s73, 0
      %s76 = sadd.s32 %s75, 1
      %s77 = scalar_select %p74, %s75, %s76
      %p80 = pneg %p74
      %p81 = scmp.eq.s32.totalorder %s13, 1
      %p82 = por %p80, %p81
      %p83 = scmp.ne.s32.totalorder %s75, %s78
      %p84 = scmp.eq.s32.totalorder %s13, 0
      %p85 = por %p83, %p84
      %p86 = scmp.ne.s32.totalorder %s75, %s78
      %p87 = scmp.eq.s32.totalorder %s18, 1
      %p88 = por %p86, %p87
      %p89 = scmp.ne.s32.totalorder %s78, %s79
      %p90 = scmp.eq.s32.totalorder %s18, 0
      %p91 = por %p89, %p90
      %p92 = scmp.ne.s32.totalorder %s78, %s79
      %p93 = scmp.eq.s32.totalorder %s19, 1
      %p94 = por %p92, %p93
      %p96 = scmp.ne.s32.totalorder %s79, %s95
      %p97 = scmp.eq.s32.totalorder %s19, 0
      %p98 = por %p96, %p97
      %s99 = ssub.s32 %s13, %s20
      %p100 = scmp.eq.s32.totalorder %s99, 0
      %s102 = sadd.s32 %s101, 1
      %s103 = scalar_select %p100, %s101, %s102
      %p106 = pneg %p100
      %p107 = scmp.eq.s32.totalorder %s13, 1
      %p108 = por %p106, %p107
      %p109 = scmp.ne.s32.totalorder %s101, %s104
      %p110 = scmp.eq.s32.totalorder %s13, 0
      %p111 = por %p109, %p110
      %p112 = scmp.ne.s32.totalorder %s101, %s104
      %p113 = scmp.eq.s32.totalorder %s18, 1
      %p114 = por %p112, %p113
      %p115 = scmp.ne.s32.totalorder %s104, %s105
      %p116 = scmp.eq.s32.totalorder %s18, 0
      %p117 = por %p115, %p116
      %p118 = scmp.ne.s32.totalorder %s104, %s105
      %p119 = scmp.eq.s32.totalorder %s19, 1
      %p120 = por %p118, %p119
      %p122 = scmp.ne.s32.totalorder %s105, %s121
      %p123 = scmp.eq.s32.totalorder %s19, 0
      %p124 = por %p122, %p123
      %p125 = scmp.le.s32.totalorder 1, %s13
      %p126 = scmp.lt.s32.totalorder %s13, 3
      %p127 = pnand %p125, %p126
      %p128 = pneg %p127
      // Predicated region
      $region9: #{tpu_custom_call.1} parent=5 // pred_check
        _
      $region10: #{tpu_custom_call.1} parent=5 // pred_check_branch
        %130 = sbr.rel (%p127) target = $region12
      $region11: #{tpu_custom_call.1} parent=5 // pred_region
        %s131 = ssub.s32 %s13, 1
      $region12: #{tpu_custom_call.1} parent=5 // pred_fallthru
        _
      %p132 = scmp.lt.s32.totalorder %s13, 2
      // Predicated region
      $region13: #{tpu_custom_call.1} parent=5 // pred_check
        %p133 = pneg %p132
      $region14: #{tpu_custom_call.1} parent=5 // pred_check_branch
        %135 = sbr.rel (%p133) target = $region16
      $region15: #{tpu_custom_call.1} parent=5 // pred_region
        // Predicated region
        $region17: #{tpu_custom_call.1} parent=15 // pred_check
          %p136 = pneg %p33
        $region18: #{tpu_custom_call.1} parent=15 // pred_check_branch
          %138 = sbr.rel (%p136) target = $region20
        $region19: #{tpu_custom_call.1} parent=15 // pred_region
          %s139 = smul.u32 13, %s13
          %s140 = ssub.s32 25, %s139
          %p141 = scmp.lt.s32.totalorder %s140, 13
          %s142 = scalar_select %p141, %s140, 13
          %s143 = smul.u32 128, %s142
          %p144 = scmp.lt.s32.totalorder %s139, 24
          %s145 = scalar_select %p144, %s139, 24
          %s146 = smul.addr %s145, 8
          %s147 = scalar_lea.vmem %s0, %s146
          %s148 = smul.u32 13, %s13
          %s149 = ssub.s32 25, %s148
          %p150 = scmp.lt.s32.totalorder %s149, 13
          %s151 = scalar_select %p150, %s149, 13
          %s152 = smul.u32 128, %s151
        $region20: #{tpu_custom_call.1} parent=15 // pred_fallthru
          _
        // Predicated region
        $region21: #{tpu_custom_call.1} parent=15 // pred_check
          %p153 = pneg %p59
        $region22: #{tpu_custom_call.1} parent=15 // pred_check_branch
          %155 = sbr.rel (%p153) target = $region24
        $region23: #{tpu_custom_call.1} parent=15 // pred_region
          %s156 = smul.u32 13, %s13
          %s157 = ssub.s32 25, %s156
          %p158 = scmp.lt.s32.totalorder %s157, 13
          %s159 = scalar_select %p158, %s157, 13
          %s160 = smul.u32 128, %s159
          %p161 = scmp.lt.s32.totalorder %s156, 24
          %s162 = scalar_select %p161, %s156, 24
          %s163 = smul.addr %s162, 8
          %s164 = scalar_lea.vmem %s1, %s163
          %s165 = smul.u32 13, %s13
          %s166 = ssub.s32 25, %s165
          %p167 = scmp.lt.s32.totalorder %s166, 13
          %s168 = scalar_select %p167, %s166, 13
          %s169 = smul.u32 128, %s168
        $region24: #{tpu_custom_call.1} parent=15 // pred_fallthru
          _
      $region16: #{tpu_custom_call.1} parent=5 // pred_fallthru
        _
      %p170 = scmp.le.s32.totalorder 1, %s13
      %p171 = scmp.lt.s32.totalorder %s13, 3
      %p172 = pnand %p170, %p171
      %p173 = pneg %p172
      // Predicated region
      $region25: #{tpu_custom_call.1} parent=5 // pred_check
        _
      $region26: #{tpu_custom_call.1} parent=5 // pred_check_branch
        %175 = sbr.rel (%p172) target = $region28
      $region27: #{tpu_custom_call.1} parent=5 // pred_region
        %s176 = ssub.s32 %s13, 1
        %s177 = smul.u32 13, %s18
        %s178 = ssub.s32 25, %s177
        %p179 = scmp.lt.s32.totalorder %s178, 13
        %s180 = scalar_select %p179, %s178, 13
        %s181 = smul.u32 128, %s180
        %p182 = scmp.lt.s32.totalorder %s177, 24
        %s183 = scalar_select %p182, %s177, 24
        %s184 = smul.addr %s183, 8
        %s185 = scalar_lea.vmem %s0, %s184
        %p186 = pneg %p39
        %p187 = pneg %p36
        %s188 = smul.u32 13, %s18
        %s189 = ssub.s32 25, %s188
        %p190 = scmp.lt.s32.totalorder %s189, 13
        %s191 = scalar_select %p190, %s189, 13
        %s192 = smul.u32 128, %s191
        %p193 = scmp.lt.s32.totalorder %s188, 24
        %s194 = scalar_select %p193, %s188, 24
        %s195 = smul.addr %s194, 8
        %s196 = scalar_lea.vmem %s1, %s195
        %p197 = pneg %p65
        %p198 = pneg %p62
        %p199 = pneg %p91
        %p200 = pneg %p88
        %s201 = sand.u32 %s78, 1
        %s202 = sand.u32 %s78, 1
        %s203 = smul.addr %s202, 104
        %s204 = scalar_lea.vmem [#allocation2], %s203
        %p205 = pneg %p117
        %p206 = pneg %p114
        %s207 = sand.u32 %s104, 1
        %s208 = scalar_lea.sflag [#allocation4], %s207
        %s209 = sand.u32 %s104, 1
        %s210 = scalar_lea.vmem [#allocation3], %s209
        %s211 = smul.u32 13, %s18
        %s212 = ssub.s32 25, %s211
        %p213 = scmp.lt.s32.totalorder %s212, 13
        %s214 = scalar_select %p213, %s212, 13
        %s215 = smul.u32 128, %s214
        %p216 = scmp.lt.s32.totalorder %s211, 24
        %s217 = scalar_select %p216, %s211, 24
        %s218 = smul.addr %s217, 8
        %s219 = scalar_lea.vmem %s0, %s218
        %s220 = smul.u32 13, %s18
        %s221 = ssub.s32 25, %s220
        %p222 = scmp.lt.s32.totalorder %s221, 13
        %s223 = scalar_select %p222, %s221, 13
        %s224 = smul.u32 128, %s223
        %s225 = smul.u32 13, %s18
        %s226 = ssub.s32 25, %s225
        %p227 = scmp.lt.s32.totalorder %s226, 13
        %s228 = scalar_select %p227, %s226, 13
        %s229 = smul.u32 128, %s228
        %p230 = scmp.lt.s32.totalorder %s225, 24
        %s231 = scalar_select %p230, %s225, 24
        %s232 = smul.addr %s231, 8
        %s233 = scalar_lea.vmem %s1, %s232
        %s234 = smul.u32 13, %s18
        %s235 = ssub.s32 25, %s234
        %p236 = scmp.lt.s32.totalorder %s235, 13
        %s237 = scalar_select %p236, %s235, 13
        %s238 = smul.u32 128, %s237
        %s239 = smul.u32 13, %s18
        %s240 = ssub.s32 25, %s239
        %p241 = scmp.lt.s32.totalorder %s240, 13
        %s242 = scalar_select %p241, %s240, 13
        %s243 = smul.u32 128, %s242
        %v244 = vld [vmem:[%s219] sm:$0xff]
        %v245 = vld [vmem:[%s219 + $0x8] sm:$0xff]
        %v246 = vld [vmem:[%s219 + $0x10] sm:$0xff]
        %v247 = vld [vmem:[%s219 + $0x18] sm:$0xff]
        %v248 = vld [vmem:[%s219 + $0x20] sm:$0xff]
        %v249 = vld [vmem:[%s219 + $0x28] sm:$0xff]
        %v250 = vld [vmem:[%s219 + $0x30] sm:$0xff]
        %v251 = vld [vmem:[%s219 + $0x38] sm:$0xff]
        %v252 = vld [vmem:[%s219 + $0x40] sm:$0xff]
        %v253 = vld [vmem:[%s219 + $0x48] sm:$0xff]
        %v254 = vld [vmem:[%s219 + $0x50] sm:$0xff]
        %v255 = vld [vmem:[%s219 + $0x58] sm:$0xff]
        %v256 = vld [vmem:[%s219 + $0x60] sm:$0xff]
        %257 = vmax.xlane.f32.xlu0 %v244
        %v258 = vpop.xlane.xlu0 %257
        %259 = vmax.xlane.f32.xlu0 %v245
        %v260 = vpop.xlane.xlu0 %259
        %261 = vmax.xlane.f32.xlu0 %v246
        %v262 = vpop.xlane.xlu0 %261
        %263 = vmax.xlane.f32.xlu0 %v247
        %v264 = vpop.xlane.xlu0 %263
        %265 = vmax.xlane.f32.xlu0 %v248
        %v266 = vpop.xlane.xlu0 %265
        %267 = vmax.xlane.f32.xlu0 %v249
        %v268 = vpop.xlane.xlu0 %267
        %269 = vmax.xlane.f32.xlu0 %v250
        %v270 = vpop.xlane.xlu0 %269
        %271 = vmax.xlane.f32.xlu0 %v251
        %v272 = vpop.xlane.xlu0 %271
        %273 = vmax.xlane.f32.xlu0 %v252
        %v274 = vpop.xlane.xlu0 %273
        %275 = vmax.xlane.f32.xlu0 %v253
        %v276 = vpop.xlane.xlu0 %275
        %277 = vmax.xlane.f32.xlu0 %v254
        %v278 = vpop.xlane.xlu0 %277
        %279 = vmax.xlane.f32.xlu0 %v255
        %v280 = vpop.xlane.xlu0 %279
        %281 = vmax.xlane.f32.xlu0 %v256
        %v282 = vpop.xlane.xlu0 %281
        %v283 = vlaneseq
        %v284 = vand.u32 %v283, 127
        %vm285 = vcmp.eq.f32.partialorder %v244, %v258
        %vm286 = vcmp.eq.f32.partialorder %v245, %v260
        %vm287 = vcmp.eq.f32.partialorder %v246, %v262
        %vm288 = vcmp.eq.f32.partialorder %v247, %v264
        %vm289 = vcmp.eq.f32.partialorder %v248, %v266
        %vm290 = vcmp.eq.f32.partialorder %v249, %v268
        %vm291 = vcmp.eq.f32.partialorder %v250, %v270
        %vm292 = vcmp.eq.f32.partialorder %v251, %v272
        %vm293 = vcmp.eq.f32.partialorder %v252, %v274
        %vm294 = vcmp.eq.f32.partialorder %v253, %v276
        %vm295 = vcmp.eq.f32.partialorder %v254, %v278
        %vm296 = vcmp.eq.f32.partialorder %v255, %v280
        %vm297 = vcmp.eq.f32.partialorder %v256, %v282
        %v298 = vsel %vm285, %v284, 128
        %v299 = vsel %vm286, %v284, 128
        %v300 = vsel %vm287, %v284, 128
        %v301 = vsel %vm288, %v284, 128
        %v302 = vsel %vm289, %v284, 128
        %v303 = vsel %vm290, %v284, 128
        %v304 = vsel %vm291, %v284, 128
        %v305 = vsel %vm292, %v284, 128
        %v306 = vsel %vm293, %v284, 128
        %v307 = vsel %vm294, %v284, 128
        %v308 = vsel %vm295, %v284, 128
        %v309 = vsel %vm296, %v284, 128
        %v310 = vsel %vm297, %v284, 128
        %v311 = vand.u32 %v298, 65535
        %v312 = vshra.s32 %v298, 16
        %v313 = vcvt.s32.f32 %v311
        %v314 = vcvt.s32.f32 %v312
        %315 = vmin.xlane.f32.xlu0 %v314
        %v316 = vpop.xlane.xlu0 %315
        %vm317 = vcmp.eq.f32.partialorder %v314, %v316
        %v318 = vsel %vm317, %v313, inf
        %319 = vmin.xlane.f32.xlu0 %v318
        %v320 = vpop.xlane.xlu0 %319
        %v321 = vcvt.f32.s32 %v320
        %v322 = vcvt.f32.s32 %v316
        %v323 = vshll.u32 %v322, 16
        %v324 = vadd.s32 %v323, %v321
        %v325 = vand.u32 %v299, 65535
        %v326 = vshra.s32 %v299, 16
        %v327 = vcvt.s32.f32 %v325
        %v328 = vcvt.s32.f32 %v326
        %329 = vmin.xlane.f32.xlu0 %v328
        %v330 = vpop.xlane.xlu0 %329
        %vm331 = vcmp.eq.f32.partialorder %v328, %v330
        %v332 = vsel %vm331, %v327, inf
        %333 = vmin.xlane.f32.xlu0 %v332
        %v334 = vpop.xlane.xlu0 %333
        %v335 = vcvt.f32.s32 %v334
        %v336 = vcvt.f32.s32 %v330
        %v337 = vshll.u32 %v336, 16
        %v338 = vadd.s32 %v337, %v335
        %v339 = vand.u32 %v300, 65535
        %v340 = vshra.s32 %v300, 16
        %v341 = vcvt.s32.f32 %v339
        %v342 = vcvt.s32.f32 %v340
        %343 = vmin.xlane.f32.xlu0 %v342
        %v344 = vpop.xlane.xlu0 %343
        %vm345 = vcmp.eq.f32.partialorder %v342, %v344
        %v346 = vsel %vm345, %v341, inf
        %347 = vmin.xlane.f32.xlu0 %v346
        %v348 = vpop.xlane.xlu0 %347
        %v349 = vcvt.f32.s32 %v348
        %v350 = vcvt.f32.s32 %v344
        %v351 = vshll.u32 %v350, 16
        %v352 = vadd.s32 %v351, %v349
        %v353 = vand.u32 %v301, 65535
        %v354 = vshra.s32 %v301, 16
        %v355 = vcvt.s32.f32 %v353
        %v356 = vcvt.s32.f32 %v354
        %357 = vmin.xlane.f32.xlu0 %v356
        %v358 = vpop.xlane.xlu0 %357
        %vm359 = vcmp.eq.f32.partialorder %v356, %v358
        %v360 = vsel %vm359, %v355, inf
        %361 = vmin.xlane.f32.xlu0 %v360
        %v362 = vpop.xlane.xlu0 %361
        %v363 = vcvt.f32.s32 %v362
        %v364 = vcvt.f32.s32 %v358
        %v365 = vshll.u32 %v364, 16
        %v366 = vadd.s32 %v365, %v363
        %v367 = vand.u32 %v302, 65535
        %v368 = vshra.s32 %v302, 16
        %v369 = vcvt.s32.f32 %v367
        %v370 = vcvt.s32.f32 %v368
        %371 = vmin.xlane.f32.xlu0 %v370
        %v372 = vpop.xlane.xlu0 %371
        %vm373 = vcmp.eq.f32.partialorder %v370, %v372
        %v374 = vsel %vm373, %v369, inf
        %375 = vmin.xlane.f32.xlu0 %v374
        %v376 = vpop.xlane.xlu0 %375
        %v377 = vcvt.f32.s32 %v376
        %v378 = vcvt.f32.s32 %v372
        %v379 = vshll.u32 %v378, 16
        %v380 = vadd.s32 %v379, %v377
        %v381 = vand.u32 %v303, 65535
        %v382 = vshra.s32 %v303, 16
        %v383 = vcvt.s32.f32 %v381
        %v384 = vcvt.s32.f32 %v382
        %385 = vmin.xlane.f32.xlu0 %v384
        %v386 = vpop.xlane.xlu0 %385
        %vm387 = vcmp.eq.f32.partialorder %v384, %v386
        %v388 = vsel %vm387, %v383, inf
        %389 = vmin.xlane.f32.xlu0 %v388
        %v390 = vpop.xlane.xlu0 %389
        %v391 = vcvt.f32.s32 %v390
        %v392 = vcvt.f32.s32 %v386
        %v393 = vshll.u32 %v392, 16
        %v394 = vadd.s32 %v393, %v391
        %v395 = vand.u32 %v304, 65535
        %v396 = vshra.s32 %v304, 16
        %v397 = vcvt.s32.f32 %v395
        %v398 = vcvt.s32.f32 %v396
        %399 = vmin.xlane.f32.xlu0 %v398
        %v400 = vpop.xlane.xlu0 %399
        %vm401 = vcmp.eq.f32.partialorder %v398, %v400
        %v402 = vsel %vm401, %v397, inf
        %403 = vmin.xlane.f32.xlu0 %v402
        %v404 = vpop.xlane.xlu0 %403
        %v405 = vcvt.f32.s32 %v404
        %v406 = vcvt.f32.s32 %v400
        %v407 = vshll.u32 %v406, 16
        %v408 = vadd.s32 %v407, %v405
        %v409 = vand.u32 %v305, 65535
        %v410 = vshra.s32 %v305, 16
        %v411 = vcvt.s32.f32 %v409
        %v412 = vcvt.s32.f32 %v410
        %413 = vmin.xlane.f32.xlu0 %v412
        %v414 = vpop.xlane.xlu0 %413
        %vm415 = vcmp.eq.f32.partialorder %v412, %v414
        %v416 = vsel %vm415, %v411, inf
        %417 = vmin.xlane.f32.xlu0 %v416
        %v418 = vpop.xlane.xlu0 %417
        %v419 = vcvt.f32.s32 %v418
        %v420 = vcvt.f32.s32 %v414
        %v421 = vshll.u32 %v420, 16
        %v422 = vadd.s32 %v421, %v419
        %v423 = vand.u32 %v306, 65535
        %v424 = vshra.s32 %v306, 16
        %v425 = vcvt.s32.f32 %v423
        %v426 = vcvt.s32.f32 %v424
        %427 = vmin.xlane.f32.xlu0 %v426
        %v428 = vpop.xlane.xlu0 %427
        %vm429 = vcmp.eq.f32.partialorder %v426, %v428
        %v430 = vsel %vm429, %v425, inf
        %431 = vmin.xlane.f32.xlu0 %v430
        %v432 = vpop.xlane.xlu0 %431
        %v433 = vcvt.f32.s32 %v432
        %v434 = vcvt.f32.s32 %v428
        %v435 = vshll.u32 %v434, 16
        %v436 = vadd.s32 %v435, %v433
        %v437 = vand.u32 %v307, 65535
        %v438 = vshra.s32 %v307, 16
        %v439 = vcvt.s32.f32 %v437
        %v440 = vcvt.s32.f32 %v438
        %441 = vmin.xlane.f32.xlu0 %v440
        %v442 = vpop.xlane.xlu0 %441
        %vm443 = vcmp.eq.f32.partialorder %v440, %v442
        %v444 = vsel %vm443, %v439, inf
        %445 = vmin.xlane.f32.xlu0 %v444
        %v446 = vpop.xlane.xlu0 %445
        %v447 = vcvt.f32.s32 %v446
        %v448 = vcvt.f32.s32 %v442
        %v449 = vshll.u32 %v448, 16
        %v450 = vadd.s32 %v449, %v447
        %v451 = vand.u32 %v308, 65535
        %v452 = vshra.s32 %v308, 16
        %v453 = vcvt.s32.f32 %v451
        %v454 = vcvt.s32.f32 %v452
        %455 = vmin.xlane.f32.xlu0 %v454
        %v456 = vpop.xlane.xlu0 %455
        %vm457 = vcmp.eq.f32.partialorder %v454, %v456
        %v458 = vsel %vm457, %v453, inf
        %459 = vmin.xlane.f32.xlu0 %v458
        %v460 = vpop.xlane.xlu0 %459
        %v461 = vcvt.f32.s32 %v460
        %v462 = vcvt.f32.s32 %v456
        %v463 = vshll.u32 %v462, 16
        %v464 = vadd.s32 %v463, %v461
        %v465 = vand.u32 %v309, 65535
        %v466 = vshra.s32 %v309, 16
        %v467 = vcvt.s32.f32 %v465
        %v468 = vcvt.s32.f32 %v466
        %469 = vmin.xlane.f32.xlu0 %v468
        %v470 = vpop.xlane.xlu0 %469
        %vm471 = vcmp.eq.f32.partialorder %v468, %v470
        %v472 = vsel %vm471, %v467, inf
        %473 = vmin.xlane.f32.xlu0 %v472
        %v474 = vpop.xlane.xlu0 %473
        %v475 = vcvt.f32.s32 %v474
        %v476 = vcvt.f32.s32 %v470
        %v477 = vshll.u32 %v476, 16
        %v478 = vadd.s32 %v477, %v475
        %v479 = vand.u32 %v310, 65535
        %v480 = vshra.s32 %v310, 16
        %v481 = vcvt.s32.f32 %v479
        %v482 = vcvt.s32.f32 %v480
        %483 = vmin.xlane.f32.xlu0 %v482
        %v484 = vpop.xlane.xlu0 %483
        %vm485 = vcmp.eq.f32.partialorder %v482, %v484
        %v486 = vsel %vm485, %v481, inf
        %487 = vmin.xlane.f32.xlu0 %v486
        %v488 = vpop.xlane.xlu0 %487
        %v489 = vcvt.f32.s32 %v488
        %v490 = vcvt.f32.s32 %v484
        %v491 = vshll.u32 %v490, 16
        %v492 = vadd.s32 %v491, %v489
        %vm493 = vcmask 7168
        %494 = vst.msk [vmem:[%s204] sm:$0xff] %vm493, %v324
        %495 = vst.msk [vmem:[%s204 + $0x8] sm:$0xff] %vm493, %v338
        %496 = vst.msk [vmem:[%s204 + $0x10] sm:$0xff] %vm493, %v352
        %497 = vst.msk [vmem:[%s204 + $0x18] sm:$0xff] %vm493, %v366
        %498 = vst.msk [vmem:[%s204 + $0x20] sm:$0xff] %vm493, %v380
        %499 = vst.msk [vmem:[%s204 + $0x28] sm:$0xff] %vm493, %v394
        %500 = vst.msk [vmem:[%s204 + $0x30] sm:$0xff] %vm493, %v408
        %501 = vst.msk [vmem:[%s204 + $0x38] sm:$0xff] %vm493, %v422
        %502 = vst.msk [vmem:[%s204 + $0x40] sm:$0xff] %vm493, %v436
        %503 = vst.msk [vmem:[%s204 + $0x48] sm:$0xff] %vm493, %v450
        %504 = vst.msk [vmem:[%s204 + $0x50] sm:$0xff] %vm493, %v464
        %505 = vst.msk [vmem:[%s204 + $0x58] sm:$0xff] %vm493, %v478
        %506 = vst.msk [vmem:[%s204 + $0x60] sm:$0xff] %vm493, %v492
        %v507 = vlaneseq
        %v508 = vshrl.u32 %v507, 7
        %v509 = vadd.s32 %v508, 8
        %v510 = vadd.s32 %v508, 16
        %v511 = vadd.s32 %v508, 24
        %v512 = vadd.s32 %v508, 32
        %v513 = vadd.s32 %v508, 40
        %v514 = vadd.s32 %v508, 48
        %v515 = vadd.s32 %v508, 56
        %v516 = vadd.s32 %v508, 64
        %v517 = vadd.s32 %v508, 72
        %v518 = vadd.s32 %v508, 80
        %v519 = vadd.s32 %v508, 88
        %v520 = vadd.s32 %v508, 96
        %s521 = smul.u32 %s18, 104
        %v522 = vstv %s521
        %v523 = vadd.s32 %v522, %v508
        %v524 = vadd.s32 %v522, %v509
        %v525 = vadd.s32 %v522, %v510
        %v526 = vadd.s32 %v522, %v511
        %v527 = vadd.s32 %v522, %v512
        %v528 = vadd.s32 %v522, %v513
        %v529 = vadd.s32 %v522, %v514
        %v530 = vadd.s32 %v522, %v515
        %v531 = vadd.s32 %v522, %v516
        %v532 = vadd.s32 %v522, %v517
        %v533 = vadd.s32 %v522, %v518
        %v534 = vadd.s32 %v522, %v519
        %v535 = vadd.s32 %v522, %v520
        %vm536 = vcmp.lt.s32.totalorder %v523, 200
        %vm537 = vcmp.lt.s32.totalorder %v524, 200
        %vm538 = vcmp.lt.s32.totalorder %v525, 200
        %vm539 = vcmp.lt.s32.totalorder %v526, 200
        %vm540 = vcmp.lt.s32.totalorder %v527, 200
        %vm541 = vcmp.lt.s32.totalorder %v528, 200
        %vm542 = vcmp.lt.s32.totalorder %v529, 200
        %vm543 = vcmp.lt.s32.totalorder %v530, 200
        %vm544 = vcmp.lt.s32.totalorder %v531, 200
        %vm545 = vcmp.lt.s32.totalorder %v532, 200
        %vm546 = vcmp.lt.s32.totalorder %v533, 200
        %vm547 = vcmp.lt.s32.totalorder %v534, 200
        %vm548 = vcmp.lt.s32.totalorder %v535, 200
        %v549 = vld [vmem:[%s233] sm:$0xff]
        %v550 = vld [vmem:[%s233 + $0x8] sm:$0xff]
        %v551 = vld [vmem:[%s233 + $0x10] sm:$0xff]
        %v552 = vld [vmem:[%s233 + $0x18] sm:$0xff]
        %v553 = vld [vmem:[%s233 + $0x20] sm:$0xff]
        %v554 = vld [vmem:[%s233 + $0x28] sm:$0xff]
        %v555 = vld [vmem:[%s233 + $0x30] sm:$0xff]
        %v556 = vld [vmem:[%s233 + $0x38] sm:$0xff]
        %v557 = vld [vmem:[%s233 + $0x40] sm:$0xff]
        %v558 = vld [vmem:[%s233 + $0x48] sm:$0xff]
        %v559 = vld [vmem:[%s233 + $0x50] sm:$0xff]
        %v560 = vld [vmem:[%s233 + $0x58] sm:$0xff]
        %v561 = vld [vmem:[%s233 + $0x60] sm:$0xff]
        %vm562 = vcmp.eq.s32.totalorder %v324, %v549
        %vm563 = vcmp.eq.s32.totalorder %v338, %v550
        %vm564 = vcmp.eq.s32.totalorder %v352, %v551
        %vm565 = vcmp.eq.s32.totalorder %v366, %v552
        %vm566 = vcmp.eq.s32.totalorder %v380, %v553
        %vm567 = vcmp.eq.s32.totalorder %v394, %v554
        %vm568 = vcmp.eq.s32.totalorder %v408, %v555
        %vm569 = vcmp.eq.s32.totalorder %v422, %v556
        %vm570 = vcmp.eq.s32.totalorder %v436, %v557
        %vm571 = vcmp.eq.s32.totalorder %v450, %v558
        %vm572 = vcmp.eq.s32.totalorder %v464, %v559
        %vm573 = vcmp.eq.s32.totalorder %v478, %v560
        %vm574 = vcmp.eq.s32.totalorder %v492, %v561
        %vm575 = vmand %vm536, %vm562
        %vm576 = vmand %vm537, %vm563
        %vm577 = vmand %vm538, %vm564
        %vm578 = vmand %vm539, %vm565
        %vm579 = vmand %vm540, %vm566
        %vm580 = vmand %vm541, %vm567
        %vm581 = vmand %vm542, %vm568
        %vm582 = vmand %vm543, %vm569
        %vm583 = vmand %vm544, %vm570
        %vm584 = vmand %vm545, %vm571
        %vm585 = vmand %vm546, %vm572
        %vm586 = vmand %vm547, %vm573
        %vm587 = vmand %vm548, %vm574
        %v588 = vsel %vm575, 1.0, 0.0
        %v589 = vsel %vm576, 1.0, 0.0
        %v590 = vsel %vm577, 1.0, 0.0
        %v591 = vsel %vm578, 1.0, 0.0
        %v592 = vsel %vm579, 1.0, 0.0
        %v593 = vsel %vm580, 1.0, 0.0
        %v594 = vsel %vm581, 1.0, 0.0
        %v595 = vsel %vm582, 1.0, 0.0
        %v596 = vsel %vm583, 1.0, 0.0
        %v597 = vsel %vm584, 1.0, 0.0
        %v598 = vsel %vm585, 1.0, 0.0
        %v599 = vsel %vm586, 1.0, 0.0
        %v600 = vsel %vm587, 1.0, 0.0
        %v601 = vsel %vm493, %v588, 0.0
        %v602 = vsel %vm493, %v589, 0.0
        %v603 = vadd.f32 %v601, %v602
        %v604 = vsel %vm493, %v590, 0.0
        %v605 = vadd.f32 %v603, %v604
        %v606 = vsel %vm493, %v591, 0.0
        %v607 = vadd.f32 %v605, %v606
        %v608 = vsel %vm493, %v592, 0.0
        %v609 = vadd.f32 %v607, %v608
        %v610 = vsel %vm493, %v593, 0.0
        %v611 = vadd.f32 %v609, %v610
        %v612 = vsel %vm493, %v594, 0.0
        %v613 = vadd.f32 %v611, %v612
        %v614 = vsel %vm493, %v595, 0.0
        %v615 = vadd.f32 %v613, %v614
        %v616 = vsel %vm493, %v596, 0.0
        %v617 = vadd.f32 %v615, %v616
        %v618 = vsel %vm493, %v597, 0.0
        %v619 = vadd.f32 %v617, %v618
        %v620 = vsel %vm493, %v598, 0.0
        %v621 = vadd.f32 %v619, %v620
        %v622 = vsel %vm493, %v599, 0.0
        %v623 = vadd.f32 %v621, %v622
        %v624 = vsel %vm493, %v600, 0.0
        %v625 = vadd.f32 %v623, %v624
        %v626 = vrot.slane %v625, 4
        %v627 = vadd.f32 %v625, %v626
        %v628 = vrot.slane %v627, 2
        %v629 = vadd.f32 %v627, %v628
        %v630 = vrot.slane %v629, 1
        %v631 = vadd.f32 %v629, %v630
        %633 = vset.pattern.permute.xlu0 0
        %634 = vperm.xlu0 %633, %v631
        %v635 = vpop.permute.xlu0 %634
        %637 = vst [vmem:[%s210] sm:$0x1] %v635
        %s638 = sand.u32 %s78, 1
        %s639 = sand.u32 %s78, 1
        %s640 = smul.addr %s639, 104
        %s641 = scalar_lea.vmem [#allocation2], %s640
        %s642 = sand.u32 %s104, 1
        %s643 = scalar_lea.sflag [#allocation4], %s642
        %s644 = sand.u32 %s104, 1
        %s645 = scalar_lea.vmem [#allocation3], %s644
        // Predicated region
        $region29: #{tpu_custom_call.1} parent=27 // pred_check
          %p646 = pneg %p88
        $region30: #{tpu_custom_call.1} parent=27 // pred_check_branch
          %648 = sbr.rel (%p646) target = $region32
        $region31: #{tpu_custom_call.1} parent=27 // pred_region
          %s649 = smul.u32 13, %s18
          %s650 = ssub.s32 25, %s649
          %p651 = scmp.lt.s32.totalorder %s650, 13
          %s652 = scalar_select %p651, %s650, 13
          %s653 = smul.u32 128, %s652
          %p654 = scmp.ne.s32.totalorder 0, %s653
          %s655 = smul.addr %s649, 8
          %s656 = scalar_lea.vmem %s2, %s655
          // Predicated region
          $region33: #{tpu_custom_call.1} parent=31 // pred_check
            %p657 = pneg %p654
          $region34: #{tpu_custom_call.1} parent=31 // pred_check_branch
            %659 = sbr.rel (%p657) target = $region36
          $region35: #{tpu_custom_call.1} parent=31 // pred_region
            // Predicated region
            $region37: #{tpu_custom_call.1} parent=35 // pred_check
              _
            $region38: #{tpu_custom_call.1} parent=35 // pred_check_branch
              %661 = sbr.rel (0) target = $region40
            $region39: #{tpu_custom_call.1} parent=35 // pred_region
              // Predicated region
              $region59: #{tpu_custom_call.1} parent=39 // pred_check
                _
              $region60: #{tpu_custom_call.1} parent=39 // pred_check_branch
                %735 = sbr.rel (0) target = $region62
              $region61: #{tpu_custom_call.1} parent=39 // pred_region
                %s736 = sdiv.u32.pop %s652, 13
                %s737 = srem.u32.pop %s652, 13
                // While loop
                $region63: #{tpu_custom_call.1} parent=61 // loop_pre_header
                  _
                $region64: #{tpu_custom_call.1} parent=61 // loop_header
                  %s739 = sphi 0, %s741
                  %p740 = scmp.ge.s32.totalorder %s739, %s736
                  %s744 = sphi 0, %s775
                  %s745 = sphi %s641, %s778
                  %s746 = sphi %s656, %s779
                $region65: #{tpu_custom_call.1} parent=61 // loop_header_branch
                  %743 = sbr.rel (%p740) target = $region69
                $region66: #{tpu_custom_call.1} parent=61 // loop_body
                  %v747 = vld [vmem:[%s745] sm:$0xff]
                  %748 = vst [vmem:[%s746] sm:$0xff] %v747
                  %v749 = vld [vmem:[%s745 + $0x8] sm:$0xff]
                  %750 = vst [vmem:[%s746 + $0x8] sm:$0xff] %v749
                  %v751 = vld [vmem:[%s745 + $0x10] sm:$0xff]
                  %752 = vst [vmem:[%s746 + $0x10] sm:$0xff] %v751
                  %v753 = vld [vmem:[%s745 + $0x18] sm:$0xff]
                  %754 = vst [vmem:[%s746 + $0x18] sm:$0xff] %v753
                  %v755 = vld [vmem:[%s745 + $0x20] sm:$0xff]
                  %756 = vst [vmem:[%s746 + $0x20] sm:$0xff] %v755
                  %v757 = vld [vmem:[%s745 + $0x28] sm:$0xff]
                  %758 = vst [vmem:[%s746 + $0x28] sm:$0xff] %v757
                  %v759 = vld [vmem:[%s745 + $0x30] sm:$0xff]
                  %760 = vst [vmem:[%s746 + $0x30] sm:$0xff] %v759
                  %v761 = vld [vmem:[%s745 + $0x38] sm:$0xff]
                  %762 = vst [vmem:[%s746 + $0x38] sm:$0xff] %v761
                  %v763 = vld [vmem:[%s745 + $0x40] sm:$0xff]
                  %764 = vst [vmem:[%s746 + $0x40] sm:$0xff] %v763
                  %v765 = vld [vmem:[%s745 + $0x48] sm:$0xff]
                  %766 = vst [vmem:[%s746 + $0x48] sm:$0xff] %v765
                  %v767 = vld [vmem:[%s745 + $0x50] sm:$0xff]
                  %768 = vst [vmem:[%s746 + $0x50] sm:$0xff] %v767
                  %v769 = vld [vmem:[%s745 + $0x58] sm:$0xff]
                  %770 = vst [vmem:[%s746 + $0x58] sm:$0xff] %v769
                  %v771 = vld [vmem:[%s745 + $0x60] sm:$0xff]
                  %772 = vst [vmem:[%s746 + $0x60] sm:$0xff] %v771
                  %s773 = sadd.s32 1, %s744
                  %p774 = scmp.ge.s32.totalorder %s773, %s736
                  %s775 = scalar_select %p774, 0, %s773
                  %s776 = smul.u32 %s775, 104
                  %s777 = smul.u32 %s775, 104
                  %s778 = scalar_lea.vmem %s641, %s776 [#allocation2]
                  %s779 = scalar_lea.vmem %s656, %s777
                $region67: #{tpu_custom_call.1} parent=61 // loop_footer
                  %s741 = sadd.s32 %s739, 1
                $region68: #{tpu_custom_call.1} parent=61 // loop_footer_branch
                  %738 = sbr.rel target = $region64
                $region69: #{tpu_custom_call.1} parent=61 // loop_exit
                  _
                %s780 = sdiv.u32.pop %s652, 13
                %s781 = srem.u32.pop %s652, 13
                %s782 = smul.u32 %s780, 13
                %s783 = smul.u32 8, %s782
                %s784 = scalar_lea.vmem %s641, %s783 [#allocation2]
                %s785 = smul.u32 8, %s782
                %s786 = scalar_lea.vmem %s656, %s785
                // While loop
                $region70: #{tpu_custom_call.1} parent=61 // loop_pre_header
                  _
                $region71: #{tpu_custom_call.1} parent=61 // loop_header
                  %s788 = sphi 0, %s790
                  %p789 = scmp.ge.s32.totalorder %s788, %s781
                  %s793 = sphi 0, %s800
                  %s794 = sphi %s784, %s803
                  %s795 = sphi %s786, %s804
                $region72: #{tpu_custom_call.1} parent=61 // loop_header_branch
                  %792 = sbr.rel (%p789) target = $region76
                $region73: #{tpu_custom_call.1} parent=61 // loop_body
                  %v796 = vld [vmem:[%s794] sm:$0xff]
                  %797 = vst [vmem:[%s795] sm:$0xff] %v796
                  %s798 = sadd.s32 1, %s793
                  %p799 = scmp.ge.s32.totalorder %s798, %s781
                  %s800 = scalar_select %p799, 0, %s798
                  %s801 = smul.u32 %s800, 8
                  %s802 = smul.u32 %s800, 8
                  %s803 = scalar_lea.vmem %s784, %s801 [#allocation2]
                  %s804 = scalar_lea.vmem %s786, %s802
                $region74: #{tpu_custom_call.1} parent=61 // loop_footer
                  %s790 = sadd.s32 %s788, 1
                $region75: #{tpu_custom_call.1} parent=61 // loop_footer_branch
                  %787 = sbr.rel target = $region71
                $region76: #{tpu_custom_call.1} parent=61 // loop_exit
                  _
              $region62: #{tpu_custom_call.1} parent=39 // pred_fallthru
                _
              // Predicated region
              $region77: #{tpu_custom_call.1} parent=39 // pred_check
                _
              $region78: #{tpu_custom_call.1} parent=39 // pred_check_branch
                %806 = sbr.rel target = $region80
              $region79: #{tpu_custom_call.1} parent=39 // pred_region
                _
              $region80: #{tpu_custom_call.1} parent=39 // pred_fallthru
                _
            $region40: #{tpu_custom_call.1} parent=35 // pred_fallthru
              _
            // Predicated region
            $region41: #{tpu_custom_call.1} parent=35 // pred_check
              _
            $region42: #{tpu_custom_call.1} parent=35 // pred_check_branch
              %663 = sbr.rel target = $region44
            $region43: #{tpu_custom_call.1} parent=35 // pred_region
              %s665 = sdiv.u32.pop %s652, 13
              %s666 = srem.u32.pop %s652, 13
              // While loop
              $region45: #{tpu_custom_call.1} parent=43 // loop_pre_header
                _
              $region46: #{tpu_custom_call.1} parent=43 // loop_header
                %s668 = sphi 0, %s670
                %p669 = scmp.ge.s32.totalorder %s668, %s665
                %s673 = sphi 0, %s704
                %s674 = sphi %s641, %s707
                %s675 = sphi %s656, %s708
              $region47: #{tpu_custom_call.1} parent=43 // loop_header_branch
                %672 = sbr.rel (%p669) target = $region51
              $region48: #{tpu_custom_call.1} parent=43 // loop_body
                %v676 = vld [vmem:[%s674] sm:$0xff]
                %677 = vst [vmem:[%s675] sm:$0xff] %v676
                %v678 = vld [vmem:[%s674 + $0x8] sm:$0xff]
                %679 = vst [vmem:[%s675 + $0x8] sm:$0xff] %v678
                %v680 = vld [vmem:[%s674 + $0x10] sm:$0xff]
                %681 = vst [vmem:[%s675 + $0x10] sm:$0xff] %v680
                %v682 = vld [vmem:[%s674 + $0x18] sm:$0xff]
                %683 = vst [vmem:[%s675 + $0x18] sm:$0xff] %v682
                %v684 = vld [vmem:[%s674 + $0x20] sm:$0xff]
                %685 = vst [vmem:[%s675 + $0x20] sm:$0xff] %v684
                %v686 = vld [vmem:[%s674 + $0x28] sm:$0xff]
                %687 = vst [vmem:[%s675 + $0x28] sm:$0xff] %v686
                %v688 = vld [vmem:[%s674 + $0x30] sm:$0xff]
                %689 = vst [vmem:[%s675 + $0x30] sm:$0xff] %v688
                %v690 = vld [vmem:[%s674 + $0x38] sm:$0xff]
                %691 = vst [vmem:[%s675 + $0x38] sm:$0xff] %v690
                %v692 = vld [vmem:[%s674 + $0x40] sm:$0xff]
                %693 = vst [vmem:[%s675 + $0x40] sm:$0xff] %v692
                %v694 = vld [vmem:[%s674 + $0x48] sm:$0xff]
                %695 = vst [vmem:[%s675 + $0x48] sm:$0xff] %v694
                %v696 = vld [vmem:[%s674 + $0x50] sm:$0xff]
                %697 = vst [vmem:[%s675 + $0x50] sm:$0xff] %v696
                %v698 = vld [vmem:[%s674 + $0x58] sm:$0xff]
                %699 = vst [vmem:[%s675 + $0x58] sm:$0xff] %v698
                %v700 = vld [vmem:[%s674 + $0x60] sm:$0xff]
                %701 = vst [vmem:[%s675 + $0x60] sm:$0xff] %v700
                %s702 = sadd.s32 1, %s673
                %p703 = scmp.ge.s32.totalorder %s702, %s665
                %s704 = scalar_select %p703, 0, %s702
                %s705 = smul.u32 %s704, 104
                %s706 = smul.u32 %s704, 104
                %s707 = scalar_lea.vmem %s641, %s705 [#allocation2]
                %s708 = scalar_lea.vmem %s656, %s706
              $region49: #{tpu_custom_call.1} parent=43 // loop_footer
                %s670 = sadd.s32 %s668, 1
              $region50: #{tpu_custom_call.1} parent=43 // loop_footer_branch
                %667 = sbr.rel target = $region46
              $region51: #{tpu_custom_call.1} parent=43 // loop_exit
                _
              %s709 = sdiv.u32.pop %s652, 13
              %s710 = srem.u32.pop %s652, 13
              %s711 = smul.u32 %s709, 13
              %s712 = smul.u32 8, %s711
              %s713 = scalar_lea.vmem %s641, %s712 [#allocation2]
              %s714 = smul.u32 8, %s711
              %s715 = scalar_lea.vmem %s656, %s714
              // While loop
              $region52: #{tpu_custom_call.1} parent=43 // loop_pre_header
                _
              $region53: #{tpu_custom_call.1} parent=43 // loop_header
                %s717 = sphi 0, %s719
                %p718 = scmp.ge.s32.totalorder %s717, %s710
                %s722 = sphi 0, %s729
                %s723 = sphi %s713, %s732
                %s724 = sphi %s715, %s733
              $region54: #{tpu_custom_call.1} parent=43 // loop_header_branch
                %721 = sbr.rel (%p718) target = $region58
              $region55: #{tpu_custom_call.1} parent=43 // loop_body
                %v725 = vld [vmem:[%s723] sm:$0xff]
                %726 = vst [vmem:[%s724] sm:$0xff] %v725
                %s727 = sadd.s32 1, %s722
                %p728 = scmp.ge.s32.totalorder %s727, %s710
                %s729 = scalar_select %p728, 0, %s727
                %s730 = smul.u32 %s729, 8
                %s731 = smul.u32 %s729, 8
                %s732 = scalar_lea.vmem %s713, %s730 [#allocation2]
                %s733 = scalar_lea.vmem %s715, %s731
              $region56: #{tpu_custom_call.1} parent=43 // loop_footer
                %s719 = sadd.s32 %s717, 1
              $region57: #{tpu_custom_call.1} parent=43 // loop_footer_branch
                %716 = sbr.rel target = $region53
              $region58: #{tpu_custom_call.1} parent=43 // loop_exit
                _
            $region44: #{tpu_custom_call.1} parent=35 // pred_fallthru
              _
          $region36: #{tpu_custom_call.1} parent=31 // pred_fallthru
            _
          %807 = vnop
        $region32: #{tpu_custom_call.1} parent=27 // pred_fallthru
          _
        // Predicated region
        $region81: #{tpu_custom_call.1} parent=27 // pred_check
          %p808 = pneg %p114
        $region82: #{tpu_custom_call.1} parent=27 // pred_check_branch
          %810 = sbr.rel (%p808) target = $region84
        $region83: #{tpu_custom_call.1} parent=27 // pred_region
          %s812 = ssub.s32 16, 16
          %813 = vsyncadd %s643, %s812
          %s814 = smul.addr %s18, 16
          %s815 = scalar_lea.hbm %s3, %s814
          %s817 = sshll.u32 %s645, 4
          %s818 = int_to_ptr.vmem [resolvable:$true] %s817
          %820 = dma.vmem_to_hbm [thread:$0]  %s818, 16, %s815, %s643
        $region84: #{tpu_custom_call.1} parent=27 // pred_fallthru
          _
      $region28: #{tpu_custom_call.1} parent=5 // pred_fallthru
        _
      %p821 = scmp.le.s32.totalorder 2, %s13
      // Predicated region
      $region85: #{tpu_custom_call.1} parent=5 // pred_check
        %p822 = pneg %p821
      $region86: #{tpu_custom_call.1} parent=5 // pred_check_branch
        %824 = sbr.rel (%p822) target = $region88
      $region87: #{tpu_custom_call.1} parent=5 // pred_region
        %s825 = ssub.s32 %s13, 2
        // Predicated region
        $region89: #{tpu_custom_call.1} parent=87 // pred_check
          %p826 = pneg %p94
        $region90: #{tpu_custom_call.1} parent=87 // pred_check_branch
          %828 = sbr.rel (%p826) target = $region92
        $region91: #{tpu_custom_call.1} parent=87 // pred_region
          %s829 = sand.u32 %s79, 1
          %s830 = sand.u32 %s79, 1
          %s831 = smul.addr %s830, 104
          %s832 = scalar_lea.vmem [#allocation2], %s831
        $region92: #{tpu_custom_call.1} parent=87 // pred_fallthru
          _
        // Predicated region
        $region93: #{tpu_custom_call.1} parent=87 // pred_check
          %p833 = pneg %p120
        $region94: #{tpu_custom_call.1} parent=87 // pred_check_branch
          %835 = sbr.rel (%p833) target = $region96
        $region95: #{tpu_custom_call.1} parent=87 // pred_region
          %s836 = sand.u32 %s105, 1
          %s837 = scalar_lea.sflag [#allocation4], %s836
          %s838 = sand.u32 %s105, 1
          %s839 = scalar_lea.vmem [#allocation3], %s838
          %840 = dma.done %s837, 16
        $region96: #{tpu_custom_call.1} parent=87 // pred_fallthru
          _
      $region88: #{tpu_custom_call.1} parent=5 // pred_fallthru
        _
    $region6: #{tpu_custom_call.1} parent=1 // loop_footer
      %s17 = sadd.s32 1, %s13
    $region7: #{tpu_custom_call.1} parent=1 // loop_footer_branch
      %12 = sbr.rel target = $region3
    $region8: #{tpu_custom_call.1} parent=1 // loop_exit
      _
    %841 = vsyncpa [#allocation4], 1
    %s842 = scalar_lea.sflag [#allocation4], 1
    %843 = vsyncpa %s842, 1

</llo_original>
